<compile_context>
chip_gen: v6e
topology: v6e:2x2x1
jax: 0.10.0
libtpu: 0.0.40
codegen_flags: <defaults>
</compile_context>

<pallas_src>
import functools

import jax
import jax.numpy as jnp
from jax.experimental import pallas as pl
from jax.experimental.pallas import tpu as pltpu

BN_EPS = 1e-5


def _simclr_proj_kernel(x_ref, w1_ref, w2_ref, bn1_ref, bn2_ref, o_ref,
                        sum1, sumsq1, st1, sum2, sumsq2, st2,
                        *, inv_batch, batch, tile_b, mask_rows, matmul_dtype):
    """Grid = (phase, batch_tile).

    bn1_ref rows: 0=gamma1, 1=beta1.  bn2_ref rows: 0=gamma2, 1=beta2.
    st1/st2 rows: 0=scale (g*rsqrt(var+eps)), 1=shift (beta - mu*scale).
    """
    phase = pl.program_id(0)
    b = pl.program_id(1)
    nb = pl.num_programs(1)

    # Layer-1 pre-BN activation for this batch tile (recomputed each phase;
    # weights are resident so only the x tile is re-streamed).
    z1 = jnp.dot(x_ref[...], w1_ref[...], preferred_element_type=jnp.float32)

    # ---------------- phase 0: accumulate layer-1 batch statistics ----------
    @pl.when(phase == 0)
    def _():
        @pl.when(b == 0)
        def _():
            sum1[...] = jnp.zeros_like(sum1)
            sumsq1[...] = jnp.zeros_like(sumsq1)

        sum1[...] += jnp.sum(z1, axis=0, keepdims=True)
        sumsq1[...] += jnp.sum(z1 * z1, axis=0, keepdims=True)

        @pl.when(b == nb - 1)
        def _():
            mu = sum1[...] * inv_batch
            var = jnp.maximum(sumsq1[...] * inv_batch - mu * mu, 0.0)
            s = bn1_ref[0:1, :] * jax.lax.rsqrt(var + BN_EPS)
            st1[0:1, :] = s
            st1[1:2, :] = bn1_ref[1:2, :] - mu * s

    # ------------- phases 1/2: apply BN1+ReLU, layer-2 matmul ---------------
    @pl.when(phase >= 1)
    def _():
        h = jnp.maximum(z1 * st1[0:1, :] + st1[1:2, :], 0.0)
        if mask_rows:
            # Zero out batch-padding rows so they don't pollute layer-2 stats.
            rows = b * tile_b + jax.lax.broadcasted_iota(jnp.int32, h.shape, 0)
            h = jnp.where(rows < batch, h, 0.0)
        z2 = jnp.dot(h.astype(matmul_dtype), w2_ref[...],
                     preferred_element_type=jnp.float32)

        # phase 1: accumulate layer-2 batch statistics
        @pl.when(phase == 1)
        def _():
            @pl.when(b == 0)
            def _():
                sum2[...] = jnp.zeros_like(sum2)
                sumsq2[...] = jnp.zeros_like(sumsq2)

            sum2[...] += jnp.sum(z2, axis=0, keepdims=True)
            sumsq2[...] += jnp.sum(z2 * z2, axis=0, keepdims=True)

            @pl.when(b == nb - 1)
            def _():
                mu = sum2[...] * inv_batch
                var = jnp.maximum(sumsq2[...] * inv_batch - mu * mu, 0.0)
                s = bn2_ref[0:1, :] * jax.lax.rsqrt(var + BN_EPS)
                st2[0:1, :] = s
                st2[1:2, :] = bn2_ref[1:2, :] - mu * s

        # phase 2: fused BN2 scale/shift, write output
        @pl.when(phase == 2)
        def _():
            o_ref[...] = (z2 * st2[0:1, :] + st2[1:2, :]).astype(o_ref.dtype)


def _round_up(n, m):
    return ((n + m - 1) // m) * m


def _pad_axis(a, n, axis):
    pad = n - a.shape[axis]
    if pad == 0:
        return a
    widths = [(0, 0)] * a.ndim
    widths[axis] = (0, pad)
    return jnp.pad(a, widths)


def simclr_projection(x, params, *, block_b=128, matmul_dtype=jnp.float32,
                      trim_output=True):
    """2-layer projection MLP forward in a single Pallas call.

    x: [B, in_dim] float32.  params: dict from init_params (weights stored
    pre-transposed as [in_features, out_features]).
    matmul_dtype: jnp.bfloat16 to use the bf16 MXU fast path (v6e/v7x);
    BN/ReLU math stays f32 either way.
    trim_output: slice back to [B, out_dim]; at production scale prefer
    consuming the padded [B_pad, f2_pad] array (padded lanes are exact zeros)
    to avoid an extra HBM copy.
    """
    assert block_b % 8 == 0
    B, in_dim = x.shape
    proj_dim = params["w1"].shape[1]
    out_dim = params["w2"].shape[1]

    # Per-layer lane-dense padding (feedback: do NOT pad both layers to max).
    in_pad = _round_up(in_dim, 128)
    f1_pad = _round_up(proj_dim, 128)
    f2_pad = _round_up(out_dim, 128)

    # Batch tiling.
    tb = min(block_b, _round_up(B, 8))
    b_pad = _round_up(B, tb)
    nb = b_pad // tb
    mask_rows = b_pad != B

    # Operand preparation (zero padding is mathematically exact everywhere;
    # padded z1 rows are exactly zero because the Linear bias is dropped).
    xp = _pad_axis(_pad_axis(x, b_pad, 0), in_pad, 1).astype(matmul_dtype)
    w1 = _pad_axis(_pad_axis(params["w1"], in_pad, 0), f1_pad, 1).astype(matmul_dtype)
    w2 = _pad_axis(_pad_axis(params["w2"], f1_pad, 0), f2_pad, 1).astype(matmul_dtype)

    bn1 = jnp.zeros((2, f1_pad), jnp.float32)
    bn1 = bn1.at[0, :proj_dim].set(params["g1"].reshape(-1))
    bn1 = bn1.at[1, :proj_dim].set(params["beta1"].reshape(-1))
    bn2 = jnp.zeros((2, f2_pad), jnp.float32)
    bn2 = bn2.at[0, :out_dim].set(params["g2"].reshape(-1))
    bn2 = bn2.at[1, :out_dim].set(params["beta2"].reshape(-1))

    kernel = functools.partial(
        _simclr_proj_kernel,
        inv_batch=1.0 / B,          # true batch size, not padded
        batch=B,
        tile_b=tb,
        mask_rows=mask_rows,
        matmul_dtype=matmul_dtype,
    )

    out = pl.pallas_call(
        kernel,
        out_shape=jax.ShapeDtypeStruct((b_pad, f2_pad), jnp.float32),
        grid_spec=pltpu.PrefetchScalarGridSpec(
            num_scalar_prefetch=0,
            grid=(3, nb),            # (phase, batch tile); phase outermost
            in_specs=[
                # x tile: re-streamed each phase (recompute-over-store).
                pl.BlockSpec((tb, in_pad), lambda p, b: (b, 0)),
                # Weights / BN params resident across the whole grid.
                pl.BlockSpec((in_pad, f1_pad), lambda p, b: (0, 0)),
                pl.BlockSpec((f1_pad, f2_pad), lambda p, b: (0, 0)),
                pl.BlockSpec((2, f1_pad), lambda p, b: (0, 0)),
                pl.BlockSpec((2, f2_pad), lambda p, b: (0, 0)),
            ],
            out_specs=pl.BlockSpec((tb, f2_pad), lambda p, b: (b, 0)),
            scratch_shapes=[
                pltpu.VMEM((1, f1_pad), jnp.float32),   # sum1
                pltpu.VMEM((1, f1_pad), jnp.float32),   # sumsq1
                pltpu.VMEM((2, f1_pad), jnp.float32),   # s1, t1
                pltpu.VMEM((1, f2_pad), jnp.float32),   # sum2
                pltpu.VMEM((1, f2_pad), jnp.float32),   # sumsq2
                pltpu.VMEM((2, f2_pad), jnp.float32),   # s2, t2
            ],
        ),
        # Stats accumulation makes both axes reductions; see TODO for the
        # v7x dual-TC partial-stats variant.  For production widths on v7x
        # also pass vmem_limit_bytes and shrink block_b for the 64 MiB VMEM.
        compiler_params=pltpu.CompilerParams(
            dimension_semantics=("arbitrary", "arbitrary")),
    )(xp, w1, w2, bn1, bn2)

    if trim_output:
        out = out[:B, :out_dim]
    return out


def init_params(key, in_dim, proj_dim, out_dim):
    """Deterministic synthetic parameters (same shapes as the PyTorch module)."""
    k1, k2, k3, k4 = jax.random.split(key, 4)
    w1 = (jax.random.normal(k1, (in_dim, proj_dim), jnp.float32)
          / jnp.sqrt(jnp.float32(in_dim)))
    b1 = jax.random.normal(k2, (1, proj_dim), jnp.float32) * 0.01
    w2 = (jax.random.normal(k3, (proj_dim, out_dim), jnp.float32)
          / jnp.sqrt(jnp.float32(proj_dim)))
    b2 = jax.random.normal(k4, (1, out_dim), jnp.float32) * 0.01
    g1 = jnp.ones((1, proj_dim), jnp.float32)
    beta1 = jnp.zeros((1, proj_dim), jnp.float32)
    g2 = jnp.ones((1, out_dim), jnp.float32)
    beta2 = jnp.zeros((1, out_dim), jnp.float32)
    return dict(w1=w1, b1=b1, g1=g1, beta1=beta1,
                w2=w2, b2=b2, g2=g2, beta2=beta2)


def _reference(x, p, matmul_dtype=jnp.float32):
    """Plain-JAX reference of the PyTorch forward.  Keeps the Linear biases to
    demonstrate they are cancelled by BatchNorm's mean subtraction."""
    def dot(a, b):
        return jnp.dot(a.astype(matmul_dtype), b.astype(matmul_dtype),
                       preferred_element_type=jnp.float32,
                       precision=jax.lax.Precision.HIGHEST)

    h = dot(x, p["w1"]) + p["b1"]
    mu = h.mean(0, keepdims=True)
    var = ((h - mu) ** 2).mean(0, keepdims=True)
    h = (h - mu) / jnp.sqrt(var + BN_EPS) * p["g1"] + p["beta1"]
    h = jnp.maximum(h, 0.0)
    y = dot(h, p["w2"]) + p["b2"]
    mu = y.mean(0, keepdims=True)
    var = ((y - mu) ** 2).mean(0, keepdims=True)
    return (y - mu) / jnp.sqrt(var + BN_EPS) * p["g2"] + p["beta2"]


if __name__ == "__main__":
    # Small shapes consistent with the module:
    #   args.hidden_dim (in_features) = 32
    #   args.projection_dim (hidden)  = 64
    #   args.cluster_hidden_dim (out) = 32
    #   args.projection_layers        = 2
    IN_DIM, PROJ_DIM, OUT_DIM = 32, 64, 32

    key = jax.random.PRNGKey(0)
    kx, kp = jax.random.split(key)

    # Case 1: toy batch, single tile (nb=1), f32 matmul.
    B = 8
    h_in = jax.random.normal(kx, (B, IN_DIM), jnp.float32)
    params = init_params(kp, IN_DIM, PROJ_DIM, OUT_DIM)
    out = jax.block_until_ready(simclr_projection(h_in, params))
    ref = _reference(h_in, params)
    assert out.shape == (B, OUT_DIM)
    assert jnp.allclose(out, ref, atol=1e-4, rtol=1e-4)

    # Case 2: B-tiled grid (nb=4) with full-batch BN statistics, f32 matmul.
    B2 = 256
    kx2, kp2 = jax.random.split(jax.random.PRNGKey(1))
    h2 = jax.random.normal(kx2, (B2, IN_DIM), jnp.float32)
    p2 = init_params(kp2, IN_DIM, PROJ_DIM, OUT_DIM)
    out2 = jax.block_until_ready(simclr_projection(h2, p2, block_b=64))
    ref2 = _reference(h2, p2)
    assert out2.shape == (B2, OUT_DIM)
    assert jnp.allclose(out2, ref2, atol=2e-3, rtol=2e-3)

    # Case 3: ragged batch (B not a multiple of the tile) exercises row masking.
    B3 = 100
    h3 = h2[:B3]
    out3 = jax.block_until_ready(simclr_projection(h3, p2, block_b=64))
    ref3 = _reference(h3, p2)
    assert out3.shape == (B3, OUT_DIM)
    assert jnp.allclose(out3, ref3, atol=2e-3, rtol=2e-3)

    # Case 4: bf16 MXU operands (v6e/v7x fast path); BN math stays f32.
    out4 = jax.block_until_ready(
        simclr_projection(h2, p2, block_b=64, matmul_dtype=jnp.bfloat16))
    ref4 = _reference(h2, p2, matmul_dtype=jnp.bfloat16)
    assert jnp.allclose(out4, ref4, atol=5e-2, rtol=5e-2)

    print("KERNEL_OK")
</pallas_src>

<mosaic_0001>
module attributes {stable_mosaic.version = 11 : i64} {
  func.func @_simclr_proj_kernel(%arg0: i32, %arg1: i32, %arg2: memref<8x128xf32, #tpu.memory_space<vmem>>, %arg3: memref<128x128xf32, #tpu.memory_space<vmem>>, %arg4: memref<128x128xf32, #tpu.memory_space<vmem>>, %arg5: memref<2x128xf32, #tpu.memory_space<vmem>>, %arg6: memref<2x128xf32, #tpu.memory_space<vmem>>, %arg7: memref<8x128xf32, #tpu.memory_space<vmem>>, %arg8: memref<1x128xf32, #tpu.memory_space<vmem>>, %arg9: memref<1x128xf32, #tpu.memory_space<vmem>>, %arg10: memref<2x128xf32, #tpu.memory_space<vmem>>, %arg11: memref<1x128xf32, #tpu.memory_space<vmem>>, %arg12: memref<1x128xf32, #tpu.memory_space<vmem>>, %arg13: memref<2x128xf32, #tpu.memory_space<vmem>>) attributes {dimension_semantics = [#tpu.dimension_semantics<arbitrary>, #tpu.dimension_semantics<arbitrary>], iteration_bounds = array<i64: 3, 1>, scalar_prefetch = 0 : i64, scratch_operands = 6 : i64, tpu.core_type = #tpu.core_type<tc>, window_params = [{transform_indices = @transform_0, window_bounds = array<i64: 8, 128>}, {pipeline_mode = #tpu.pipeline_mode<synchronous>, transform_indices = @transform_1, window_bounds = array<i64: 128, 128>}, {pipeline_mode = #tpu.pipeline_mode<synchronous>, transform_indices = @transform_2, window_bounds = array<i64: 128, 128>}, {pipeline_mode = #tpu.pipeline_mode<synchronous>, transform_indices = @transform_3, window_bounds = array<i64: 2, 128>}, {pipeline_mode = #tpu.pipeline_mode<synchronous>, transform_indices = @transform_4, window_bounds = array<i64: 2, 128>}, {transform_indices = @transform_5, window_bounds = array<i64: 8, 128>}]} {
    %c0 = arith.constant 0 : index
    %c0_0 = arith.constant 0 : index
    %0 = vector.load %arg2[%c0, %c0_0] : memref<8x128xf32, #tpu.memory_space<vmem>>, vector<8x128xf32>
    %c0_1 = arith.constant 0 : index
    %c0_2 = arith.constant 0 : index
    %1 = vector.load %arg3[%c0_1, %c0_2] : memref<128x128xf32, #tpu.memory_space<vmem>>, vector<128x128xf32>
    %cst = arith.constant dense<0.000000e+00> : vector<8x128xf32>
    %2 = tpu.matmul %0, %1, %cst {dimension_numbers = #tpu.dot_dimension_numbers<[1], [0], [0], [1], [0, 0, 1, 1], [], []>} : vector<8x128xf32>, vector<128x128xf32>, vector<8x128xf32> -> vector<8x128xf32>
    %c0_i32 = arith.constant 0 : i32
    %3 = arith.cmpi eq, %arg0, %c0_i32 : i32
    %4 = arith.extui %3 : i1 to i32
    %c0_i32_3 = arith.constant 0 : i32
    %5 = arith.cmpi ne, %4, %c0_i32_3 : i32
    scf.if %5 {
      %c0_i32_5 = arith.constant 0 : i32
      %9 = arith.cmpi eq, %arg1, %c0_i32_5 : i32
      %10 = arith.extui %9 : i1 to i32
      %c0_i32_6 = arith.constant 0 : i32
      %11 = arith.cmpi ne, %10, %c0_i32_6 : i32
      scf.if %11 {
        %cst_19 = arith.constant 0.000000e+00 : f32
        %26 = vector.broadcast %cst_19 : f32 to vector<1x128xf32>
        %c0_20 = arith.constant 0 : index
        %c0_21 = arith.constant 0 : index
        %27 = vector.load %arg8[%c0_20, %c0_21] : memref<1x128xf32, #tpu.memory_space<vmem>>, vector<1x128xf32>
        tpu.vector_store %arg8[%c0_20, %c0_21], %26 {strides = array<i32>} : memref<1x128xf32, #tpu.memory_space<vmem>>, vector<1x128xf32>,
        %cst_22 = arith.constant 0.000000e+00 : f32
        %28 = vector.broadcast %cst_22 : f32 to vector<1x128xf32>
        %c0_23 = arith.constant 0 : index
        %c0_24 = arith.constant 0 : index
        %29 = vector.load %arg9[%c0_23, %c0_24] : memref<1x128xf32, #tpu.memory_space<vmem>>, vector<1x128xf32>
        tpu.vector_store %arg9[%c0_23, %c0_24], %28 {strides = array<i32>} : memref<1x128xf32, #tpu.memory_space<vmem>>, vector<1x128xf32>,
      } else {
      }
      %c0_7 = arith.constant 0 : index
      %c0_8 = arith.constant 0 : index
      %12 = vector.load %arg8[%c0_7, %c0_8] : memref<1x128xf32, #tpu.memory_space<vmem>>, vector<1x128xf32>
      %cst_9 = arith.constant dense<0.000000e+00> : vector<128xf32>
      %13 = vector.multi_reduction <add>, %2, %cst_9 [0] : vector<8x128xf32> to vector<128xf32>
      %14 = vector.shape_cast %13 : vector<128xf32> to vector<1x128xf32>
      %15 = arith.addf %12, %14 : vector<1x128xf32>
      %c0_10 = arith.constant 0 : index
      %c0_11 = arith.constant 0 : index
      %16 = vector.load %arg8[%c0_10, %c0_11] : memref<1x128xf32, #tpu.memory_space<vmem>>, vector<1x128xf32>
      tpu.vector_store %arg8[%c0_10, %c0_11], %15 {strides = array<i32>} : memref<1x128xf32, #tpu.memory_space<vmem>>, vector<1x128xf32>,
      %c0_12 = arith.constant 0 : index
      %c0_13 = arith.constant 0 : index
      %17 = vector.load %arg9[%c0_12, %c0_13] : memref<1x128xf32, #tpu.memory_space<vmem>>, vector<1x128xf32>
      %18 = arith.mulf %2, %2 : vector<8x128xf32>
      %cst_14 = arith.constant dense<0.000000e+00> : vector<128xf32>
      %19 = vector.multi_reduction <add>, %18, %cst_14 [0] : vector<8x128xf32> to vector<128xf32>
      %20 = vector.shape_cast %19 : vector<128xf32> to vector<1x128xf32>
      %21 = arith.addf %17, %20 : vector<1x128xf32>
      %c0_15 = arith.constant 0 : index
      %c0_16 = arith.constant 0 : index
      %22 = vector.load %arg9[%c0_15, %c0_16] : memref<1x128xf32, #tpu.memory_space<vmem>>, vector<1x128xf32>
      tpu.vector_store %arg9[%c0_15, %c0_16], %21 {strides = array<i32>} : memref<1x128xf32, #tpu.memory_space<vmem>>, vector<1x128xf32>,
      %c0_i32_17 = arith.constant 0 : i32
      %23 = arith.cmpi eq, %arg1, %c0_i32_17 : i32
      %24 = arith.extui %23 : i1 to i32
      %c0_i32_18 = arith.constant 0 : i32
      %25 = arith.cmpi ne, %24, %c0_i32_18 : i32
      scf.if %25 {
        %c0_19 = arith.constant 0 : index
        %c0_20 = arith.constant 0 : index
        %26 = vector.load %arg8[%c0_19, %c0_20] : memref<1x128xf32, #tpu.memory_space<vmem>>, vector<1x128xf32>
        %cst_21 = arith.constant 1.250000e-01 : f32
        %27 = vector.broadcast %cst_21 : f32 to vector<1x128xf32>
        %28 = arith.mulf %26, %27 : vector<1x128xf32>
        %c0_22 = arith.constant 0 : index
        %c0_23 = arith.constant 0 : index
        %29 = vector.load %arg9[%c0_22, %c0_23] : memref<1x128xf32, #tpu.memory_space<vmem>>, vector<1x128xf32>
        %cst_24 = arith.constant 1.250000e-01 : f32
        %30 = vector.broadcast %cst_24 : f32 to vector<1x128xf32>
        %31 = arith.mulf %29, %30 : vector<1x128xf32>
        %32 = arith.mulf %28, %28 : vector<1x128xf32>
        %33 = arith.subf %31, %32 : vector<1x128xf32>
        %cst_25 = arith.constant 0.000000e+00 : f32
        %34 = vector.broadcast %cst_25 : f32 to vector<1x128xf32>
        %35 = arith.maximumf %33, %34 : vector<1x128xf32>
        %c0_26 = arith.constant 0 : index
        %c0_27 = arith.constant 0 : index
        %36 = vector.load %arg5[%c0_26, %c0_27] : memref<2x128xf32, #tpu.memory_space<vmem>>, vector<1x128xf32>
        %cst_28 = arith.constant 9.99999974E-6 : f32
        %37 = vector.broadcast %cst_28 : f32 to vector<1x128xf32>
        %38 = arith.addf %35, %37 : vector<1x128xf32>
        %39 = math.rsqrt %38 : vector<1x128xf32>
        %40 = arith.mulf %36, %39 : vector<1x128xf32>
        %c0_29 = arith.constant 0 : index
        %c0_30 = arith.constant 0 : index
        %41 = vector.load %arg10[%c0_29, %c0_30] : memref<2x128xf32, #tpu.memory_space<vmem>>, vector<1x128xf32>
        tpu.vector_store %arg10[%c0_29, %c0_30], %40 {strides = array<i32>} : memref<2x128xf32, #tpu.memory_space<vmem>>, vector<1x128xf32>,
        %c1 = arith.constant 1 : index
        %c0_31 = arith.constant 0 : index
        %42 = vector.load %arg5[%c1, %c0_31] : memref<2x128xf32, #tpu.memory_space<vmem>>, vector<1x128xf32>
        %43 = arith.mulf %28, %40 : vector<1x128xf32>
        %44 = arith.subf %42, %43 : vector<1x128xf32>
        %c1_32 = arith.constant 1 : index
        %c0_33 = arith.constant 0 : index
        %45 = vector.load %arg10[%c1_32, %c0_33] : memref<2x128xf32, #tpu.memory_space<vmem>>, vector<1x128xf32>
        tpu.vector_store %arg10[%c1_32, %c0_33], %44 {strides = array<i32>} : memref<2x128xf32, #tpu.memory_space<vmem>>, vector<1x128xf32>,
      } else {
      }
    } else {
    }
    %c1_i32 = arith.constant 1 : i32
    %6 = arith.cmpi sge, %arg0, %c1_i32 : i32
    %7 = arith.extui %6 : i1 to i32
    %c0_i32_4 = arith.constant 0 : i32
    %8 = arith.cmpi ne, %7, %c0_i32_4 : i32
    scf.if %8 {
      %c0_5 = arith.constant 0 : index
      %c0_6 = arith.constant 0 : index
      %9 = vector.load %arg10[%c0_5, %c0_6] : memref<2x128xf32, #tpu.memory_space<vmem>>, vector<1x128xf32>
      %10 = vector.broadcast %9 : vector<1x128xf32> to vector<8x128xf32>
      %11 = arith.mulf %2, %10 : vector<8x128xf32>
      %c1 = arith.constant 1 : index
      %c0_7 = arith.constant 0 : index
      %12 = vector.load %arg10[%c1, %c0_7] : memref<2x128xf32, #tpu.memory_space<vmem>>, vector<1x128xf32>
      %13 = vector.broadcast %12 : vector<1x128xf32> to vector<8x128xf32>
      %14 = arith.addf %11, %13 : vector<8x128xf32>
      %cst_8 = arith.constant 0.000000e+00 : f32
      %15 = vector.broadcast %cst_8 : f32 to vector<8x128xf32>
      %16 = arith.maximumf %14, %15 : vector<8x128xf32>
      %c0_9 = arith.constant 0 : index
      %c0_10 = arith.constant 0 : index
      %17 = vector.load %arg4[%c0_9, %c0_10] : memref<128x128xf32, #tpu.memory_space<vmem>>, vector<128x128xf32>
      %cst_11 = arith.constant dense<0.000000e+00> : vector<8x128xf32>
      %18 = tpu.matmul %16, %17, %cst_11 {dimension_numbers = #tpu.dot_dimension_numbers<[1], [0], [0], [1], [0, 0, 1, 1], [], []>} : vector<8x128xf32>, vector<128x128xf32>, vector<8x128xf32> -> vector<8x128xf32>
      %c1_i32_12 = arith.constant 1 : i32
      %19 = arith.cmpi eq, %arg0, %c1_i32_12 : i32
      %20 = arith.extui %19 : i1 to i32
      %c0_i32_13 = arith.constant 0 : i32
      %21 = arith.cmpi ne, %20, %c0_i32_13 : i32
      scf.if %21 {
        %c0_i32_15 = arith.constant 0 : i32
        %25 = arith.cmpi eq, %arg1, %c0_i32_15 : i32
        %26 = arith.extui %25 : i1 to i32
        %c0_i32_16 = arith.constant 0 : i32
        %27 = arith.cmpi ne, %26, %c0_i32_16 : i32
        scf.if %27 {
          %cst_29 = arith.constant 0.000000e+00 : f32
          %42 = vector.broadcast %cst_29 : f32 to vector<1x128xf32>
          %c0_30 = arith.constant 0 : index
          %c0_31 = arith.constant 0 : index
          %43 = vector.load %arg11[%c0_30, %c0_31] : memref<1x128xf32, #tpu.memory_space<vmem>>, vector<1x128xf32>
          tpu.vector_store %arg11[%c0_30, %c0_31], %42 {strides = array<i32>} : memref<1x128xf32, #tpu.memory_space<vmem>>, vector<1x128xf32>,
          %cst_32 = arith.constant 0.000000e+00 : f32
          %44 = vector.broadcast %cst_32 : f32 to vector<1x128xf32>
          %c0_33 = arith.constant 0 : index
          %c0_34 = arith.constant 0 : index
          %45 = vector.load %arg12[%c0_33, %c0_34] : memref<1x128xf32, #tpu.memory_space<vmem>>, vector<1x128xf32>
          tpu.vector_store %arg12[%c0_33, %c0_34], %44 {strides = array<i32>} : memref<1x128xf32, #tpu.memory_space<vmem>>, vector<1x128xf32>,
        } else {
        }
        %c0_17 = arith.constant 0 : index
        %c0_18 = arith.constant 0 : index
        %28 = vector.load %arg11[%c0_17, %c0_18] : memref<1x128xf32, #tpu.memory_space<vmem>>, vector<1x128xf32>
        %cst_19 = arith.constant dense<0.000000e+00> : vector<128xf32>
        %29 = vector.multi_reduction <add>, %18, %cst_19 [0] : vector<8x128xf32> to vector<128xf32>
        %30 = vector.shape_cast %29 : vector<128xf32> to vector<1x128xf32>
        %31 = arith.addf %28, %30 : vector<1x128xf32>
        %c0_20 = arith.constant 0 : index
        %c0_21 = arith.constant 0 : index
        %32 = vector.load %arg11[%c0_20, %c0_21] : memref<1x128xf32, #tpu.memory_space<vmem>>, vector<1x128xf32>
        tpu.vector_store %arg11[%c0_20, %c0_21], %31 {strides = array<i32>} : memref<1x128xf32, #tpu.memory_space<vmem>>, vector<1x128xf32>,
        %c0_22 = arith.constant 0 : index
        %c0_23 = arith.constant 0 : index
        %33 = vector.load %arg12[%c0_22, %c0_23] : memref<1x128xf32, #tpu.memory_space<vmem>>, vector<1x128xf32>
        %34 = arith.mulf %18, %18 : vector<8x128xf32>
        %cst_24 = arith.constant dense<0.000000e+00> : vector<128xf32>
        %35 = vector.multi_reduction <add>, %34, %cst_24 [0] : vector<8x128xf32> to vector<128xf32>
        %36 = vector.shape_cast %35 : vector<128xf32> to vector<1x128xf32>
        %37 = arith.addf %33, %36 : vector<1x128xf32>
        %c0_25 = arith.constant 0 : index
        %c0_26 = arith.constant 0 : index
        %38 = vector.load %arg12[%c0_25, %c0_26] : memref<1x128xf32, #tpu.memory_space<vmem>>, vector<1x128xf32>
        tpu.vector_store %arg12[%c0_25, %c0_26], %37 {strides = array<i32>} : memref<1x128xf32, #tpu.memory_space<vmem>>, vector<1x128xf32>,
        %c0_i32_27 = arith.constant 0 : i32
        %39 = arith.cmpi eq, %arg1, %c0_i32_27 : i32
        %40 = arith.extui %39 : i1 to i32
        %c0_i32_28 = arith.constant 0 : i32
        %41 = arith.cmpi ne, %40, %c0_i32_28 : i32
        scf.if %41 {
          %c0_29 = arith.constant 0 : index
          %c0_30 = arith.constant 0 : index
          %42 = vector.load %arg11[%c0_29, %c0_30] : memref<1x128xf32, #tpu.memory_space<vmem>>, vector<1x128xf32>
          %cst_31 = arith.constant 1.250000e-01 : f32
          %43 = vector.broadcast %cst_31 : f32 to vector<1x128xf32>
          %44 = arith.mulf %42, %43 : vector<1x128xf32>
          %c0_32 = arith.constant 0 : index
          %c0_33 = arith.constant 0 : index
          %45 = vector.load %arg12[%c0_32, %c0_33] : memref<1x128xf32, #tpu.memory_space<vmem>>, vector<1x128xf32>
          %cst_34 = arith.constant 1.250000e-01 : f32
          %46 = vector.broadcast %cst_34 : f32 to vector<1x128xf32>
          %47 = arith.mulf %45, %46 : vector<1x128xf32>
          %48 = arith.mulf %44, %44 : vector<1x128xf32>
          %49 = arith.subf %47, %48 : vector<1x128xf32>
          %cst_35 = arith.constant 0.000000e+00 : f32
          %50 = vector.broadcast %cst_35 : f32 to vector<1x128xf32>
          %51 = arith.maximumf %49, %50 : vector<1x128xf32>
          %c0_36 = arith.constant 0 : index
          %c0_37 = arith.constant 0 : index
          %52 = vector.load %arg6[%c0_36, %c0_37] : memref<2x128xf32, #tpu.memory_space<vmem>>, vector<1x128xf32>
          %cst_38 = arith.constant 9.99999974E-6 : f32
          %53 = vector.broadcast %cst_38 : f32 to vector<1x128xf32>
          %54 = arith.addf %51, %53 : vector<1x128xf32>
          %55 = math.rsqrt %54 : vector<1x128xf32>
          %56 = arith.mulf %52, %55 : vector<1x128xf32>
          %c0_39 = arith.constant 0 : index
          %c0_40 = arith.constant 0 : index
          %57 = vector.load %arg13[%c0_39, %c0_40] : memref<2x128xf32, #tpu.memory_space<vmem>>, vector<1x128xf32>
          tpu.vector_store %arg13[%c0_39, %c0_40], %56 {strides = array<i32>} : memref<2x128xf32, #tpu.memory_space<vmem>>, vector<1x128xf32>,
          %c1_41 = arith.constant 1 : index
          %c0_42 = arith.constant 0 : index
          %58 = vector.load %arg6[%c1_41, %c0_42] : memref<2x128xf32, #tpu.memory_space<vmem>>, vector<1x128xf32>
          %59 = arith.mulf %44, %56 : vector<1x128xf32>
          %60 = arith.subf %58, %59 : vector<1x128xf32>
          %c1_43 = arith.constant 1 : index
          %c0_44 = arith.constant 0 : index
          %61 = vector.load %arg13[%c1_43, %c0_44] : memref<2x128xf32, #tpu.memory_space<vmem>>, vector<1x128xf32>
          tpu.vector_store %arg13[%c1_43, %c0_44], %60 {strides = array<i32>} : memref<2x128xf32, #tpu.memory_space<vmem>>, vector<1x128xf32>,
        } else {
        }
      } else {
      }
      %c2_i32 = arith.constant 2 : i32
      %22 = arith.cmpi eq, %arg0, %c2_i32 : i32
      %23 = arith.extui %22 : i1 to i32
      %c0_i32_14 = arith.constant 0 : i32
      %24 = arith.cmpi ne, %23, %c0_i32_14 : i32
      scf.if %24 {
        %c0_15 = arith.constant 0 : index
        %c0_16 = arith.constant 0 : index
        %25 = vector.load %arg13[%c0_15, %c0_16] : memref<2x128xf32, #tpu.memory_space<vmem>>, vector<1x128xf32>
        %26 = vector.broadcast %25 : vector<1x128xf32> to vector<8x128xf32>
        %27 = arith.mulf %18, %26 : vector<8x128xf32>
        %c1_17 = arith.constant 1 : index
        %c0_18 = arith.constant 0 : index
        %28 = vector.load %arg13[%c1_17, %c0_18] : memref<2x128xf32, #tpu.memory_space<vmem>>, vector<1x128xf32>
        %29 = vector.broadcast %28 : vector<1x128xf32> to vector<8x128xf32>
        %30 = arith.addf %27, %29 : vector<8x128xf32>
        %c0_19 = arith.constant 0 : index
        %c0_20 = arith.constant 0 : index
        %31 = vector.load %arg7[%c0_19, %c0_20] : memref<8x128xf32, #tpu.memory_space<vmem>>, vector<8x128xf32>
        tpu.vector_store %arg7[%c0_19, %c0_20], %30 {strides = array<i32>} : memref<8x128xf32, #tpu.memory_space<vmem>>, vector<8x128xf32>,
      } else {
      }
    } else {
    }
    return
  }
  func.func @transform_0(%arg0: i32, %arg1: i32) -> (i32, i32) {
    %c0_i32 = arith.constant 0 : i32
    %c0_i32_0 = arith.constant 0 : i32
    return %arg1, %c0_i32 : i32, i32
  }
  func.func @transform_1(%arg0: i32, %arg1: i32) -> (i32, i32) {
    %c0_i32 = arith.constant 0 : i32
    %c0_i32_0 = arith.constant 0 : i32
    %c0_i32_1 = arith.constant 0 : i32
    return %c0_i32, %c0_i32_0 : i32, i32
  }
  func.func @transform_2(%arg0: i32, %arg1: i32) -> (i32, i32) {
    %c0_i32 = arith.constant 0 : i32
    %c0_i32_0 = arith.constant 0 : i32
    %c0_i32_1 = arith.constant 0 : i32
    return %c0_i32, %c0_i32_0 : i32, i32
  }
  func.func @transform_3(%arg0: i32, %arg1: i32) -> (i32, i32) {
    %c0_i32 = arith.constant 0 : i32
    %c0_i32_0 = arith.constant 0 : i32
    %c0_i32_1 = arith.constant 0 : i32
    return %c0_i32, %c0_i32_0 : i32, i32
  }
  func.func @transform_4(%arg0: i32, %arg1: i32) -> (i32, i32) {
    %c0_i32 = arith.constant 0 : i32
    %c0_i32_0 = arith.constant 0 : i32
    %c0_i32_1 = arith.constant 0 : i32
    return %c0_i32, %c0_i32_0 : i32, i32
  }
  func.func @transform_5(%arg0: i32, %arg1: i32) -> (i32, i32) {
    %c0_i32 = arith.constant 0 : i32
    %c0_i32_0 = arith.constant 0 : i32
    return %arg1, %c0_i32 : i32, i32
  }
}

</mosaic_0001>

<llo_original>
// kernel: tpu_custom_call.1
$region0: #{tpu_custom_call.1}
  #allocation0 [shape = 'u32[]', space=smem, size = 0x4, offset = 0x4, fixed_abs, tag = 'smem constant byte address 0x4 - core index']
  #allocation1 [shape = 'u32[144,128]{1,0:T(1,128)}', space=vmem, size = 0x12000, scoped, tag = 'internal scratch']
  #allocation2 [shape = 'f32[1,128]{1,0:T(1,128)}', space=vmem, size = 0x200, scoped, tag = 'scratch operand']
  #allocation3 [shape = 'f32[1,128]{1,0:T(1,128)}', space=vmem, size = 0x200, scoped, tag = 'scratch operand']
  #allocation4 [shape = 'f32[2,128]{1,0:T(2,128)}', space=vmem, size = 0x400, scoped, tag = 'scratch operand']
  #allocation5 [shape = 'f32[1,128]{1,0:T(1,128)}', space=vmem, size = 0x200, scoped, tag = 'scratch operand']
  #allocation6 [shape = 'f32[1,128]{1,0:T(1,128)}', space=vmem, size = 0x200, scoped, tag = 'scratch operand']
  #allocation7 [shape = 'f32[2,128]{1,0:T(2,128)}', space=vmem, size = 0x400, scoped, tag = 'scratch operand']
  %s0 = inlined_call_operand.hbm [shape: f32[8,128], index: 0, kind: input, shape index: {}]
  %s1 = inlined_call_operand.hbm [shape: f32[128,128], index: 1, kind: input, shape index: {}]
  %s2 = inlined_call_operand.hbm [shape: f32[128,128], index: 2, kind: input, shape index: {}]
  %s3 = inlined_call_operand.vmem [shape: f32[2,128], index: 3, kind: input, shape index: {}]
  %s4 = inlined_call_operand.vmem [shape: f32[2,128], index: 4, kind: input, shape index: {}]
  %s5 = inlined_call_operand.hbm [shape: f32[8,128], index: 5, kind: output, shape index: {}]
  %s6 = sld [smem:[#allocation0]]
  $region97: #{tpu_custom_call.1} parent=0
    _
  %s8 = ssub.s32 1, %s6
  %s9 = scalar_select 0, %s8, %s6
  $region1: #{tpu_custom_call.1} parent=0
    #allocation8 [shape = 'u8[4096]{0}', space=vmem, size = 0x1000, scoped, tag = 'input window, operand 0, single buffered']
    #allocation9 [shape = 's32[2]{0}', space=sflag, size = 0x8, scoped, tag = 'scoped memory for tpu_custom_call.1']
    #allocation10 [shape = 's32[2]{0}', space=sflag, size = 0x8, scoped, tag = 'scoped memory for tpu_custom_call.1']
    #allocation11 [shape = 'u8[65536]{0}', space=vmem, size = 0x10000, scoped, tag = 'input window, operand 1, single buffered']
    #allocation12 [shape = 's32[1]{0}', space=sflag, size = 0x4, scoped, tag = 'scoped memory for tpu_custom_call.1']
    #allocation13 [shape = 'u8[65536]{0}', space=vmem, size = 0x10000, scoped, tag = 'input window, operand 2, single buffered']
    #allocation14 [shape = 'u8[4096]{0}', space=vmem, size = 0x1000, scoped, tag = 'output window, operand 0, single buffered']
    %10 = vsyncpa [#allocation9], 0
    %11 = vsyncpa [#allocation12], 0
    %12 = vsyncpa [#allocation10], 0
    loop: start=0, step=1, limit=5
    $region2: #{tpu_custom_call.1} parent=1 // loop_pre_header
      _
    $region3: #{tpu_custom_call.1} parent=1 // loop_header
      %s14 = sphi 0, %s18
      %p15 = scmp.ge.s32.totalorder %s14, 5
      %s21 = sphi 0, %s33
      %s22 = sphi 0, %s29
      %s23 = sphi 0, %s21
      %s24 = sphi 0, %s22
      %s25 = sphi 0, %s23
      %s26 = sphi 0, %s24
      %s36 = sphi 0, %s38
      %s39 = sphi 0, %s36
      %s40 = sphi 0, %s39
      %s56 = sphi 0, %s40
      %s60 = sphi 0, %s60
      %s62 = sphi 0, %s60
      %s63 = sphi 0, %s62
      %s77 = sphi 0, %s63
      %s81 = sphi 0, %s81
      %s83 = sphi 0, %s81
      %s84 = sphi 0, %s83
      %s98 = sphi 0, %s84
      %s102 = sphi 0, %s102
      %s104 = sphi 0, %s102
      %s105 = sphi 0, %s104
      %s119 = sphi 0, %s105
      %s123 = sphi 0, %s123
      %s125 = sphi 0, %s123
      %s126 = sphi 0, %s125
      %s140 = sphi 0, %s126
      %s146 = sphi 0, %s148
      %s149 = sphi 0, %s146
      %s150 = sphi 0, %s149
      %s166 = sphi 0, %s150
    $region4: #{tpu_custom_call.1} parent=1 // loop_header_branch
      %17 = sbr.rel (%p15) target = $region8
    $region5: #{tpu_custom_call.1} parent=1 // loop_body
      %s19 = ssub.s32 %s14, 1
      %s20 = ssub.s32 %s14, 2
      %s27 = sadd.s32 1, %s22
      %p28 = scmp.ge.s32.totalorder %s27, 1
      %s29 = scalar_select %p28, 0, %s27
      %s30 = sadd.s32 1, %s21
      %s31 = scalar_select %p28, %s30, %s21
      %p32 = scmp.ge.s32.totalorder %s31, 3
      %s33 = scalar_select %p32, 0, %s31
      %s34 = ssub.s32 %s22, %s29
      %p35 = scmp.eq.s32.totalorder %s34, 0
      %s37 = sadd.s32 %s36, 1
      %s38 = scalar_select %p35, %s36, %s37
      %p41 = pneg %p35
      %p42 = scmp.eq.s32.totalorder %s14, 2
      %p43 = por %p41, %p42
      %p44 = scmp.ne.s32.totalorder %s36, %s39
      %p45 = scmp.eq.s32.totalorder %s14, 0
      %p46 = por %p44, %p45
      %p47 = scmp.ne.s32.totalorder %s36, %s39
      %p48 = scmp.eq.s32.totalorder %s19, 2
      %p49 = por %p47, %p48
      %p50 = scmp.ne.s32.totalorder %s39, %s40
      %p51 = scmp.eq.s32.totalorder %s19, 0
      %p52 = por %p50, %p51
      %p53 = scmp.ne.s32.totalorder %s39, %s40
      %p54 = scmp.eq.s32.totalorder %s20, 2
      %p55 = por %p53, %p54
      %p57 = scmp.ne.s32.totalorder %s40, %s56
      %p58 = scmp.eq.s32.totalorder %s20, 0
      %p59 = por %p57, %p58
      %s61 = sadd.s32 %s60, 1
      %p64 = scmp.eq.s32.totalorder %s14, 2
      %p65 = scmp.ne.s32.totalorder %s60, %s62
      %p66 = scmp.eq.s32.totalorder %s14, 0
      %p67 = por %p65, %p66
      %p68 = scmp.ne.s32.totalorder %s60, %s62
      %p69 = scmp.eq.s32.totalorder %s19, 2
      %p70 = por %p68, %p69
      %p71 = scmp.ne.s32.totalorder %s62, %s63
      %p72 = scmp.eq.s32.totalorder %s19, 0
      %p73 = por %p71, %p72
      %p74 = scmp.ne.s32.totalorder %s62, %s63
      %p75 = scmp.eq.s32.totalorder %s20, 2
      %p76 = por %p74, %p75
      %p78 = scmp.ne.s32.totalorder %s63, %s77
      %p79 = scmp.eq.s32.totalorder %s20, 0
      %p80 = por %p78, %p79
      %s82 = sadd.s32 %s81, 1
      %p85 = scmp.eq.s32.totalorder %s14, 2
      %p86 = scmp.ne.s32.totalorder %s81, %s83
      %p87 = scmp.eq.s32.totalorder %s14, 0
      %p88 = por %p86, %p87
      %p89 = scmp.ne.s32.totalorder %s81, %s83
      %p90 = scmp.eq.s32.totalorder %s19, 2
      %p91 = por %p89, %p90
      %p92 = scmp.ne.s32.totalorder %s83, %s84
      %p93 = scmp.eq.s32.totalorder %s19, 0
      %p94 = por %p92, %p93
      %p95 = scmp.ne.s32.totalorder %s83, %s84
      %p96 = scmp.eq.s32.totalorder %s20, 2
      %p97 = por %p95, %p96
      %p99 = scmp.ne.s32.totalorder %s84, %s98
      %p100 = scmp.eq.s32.totalorder %s20, 0
      %p101 = por %p99, %p100
      %s103 = sadd.s32 %s102, 1
      %p106 = scmp.eq.s32.totalorder %s14, 2
      %p107 = scmp.ne.s32.totalorder %s102, %s104
      %p108 = scmp.eq.s32.totalorder %s14, 0
      %p109 = por %p107, %p108
      %p110 = scmp.ne.s32.totalorder %s102, %s104
      %p111 = scmp.eq.s32.totalorder %s19, 2
      %p112 = por %p110, %p111
      %p113 = scmp.ne.s32.totalorder %s104, %s105
      %p114 = scmp.eq.s32.totalorder %s19, 0
      %p115 = por %p113, %p114
      %p116 = scmp.ne.s32.totalorder %s104, %s105
      %p117 = scmp.eq.s32.totalorder %s20, 2
      %p118 = por %p116, %p117
      %p120 = scmp.ne.s32.totalorder %s105, %s119
      %p121 = scmp.eq.s32.totalorder %s20, 0
      %p122 = por %p120, %p121
      %s124 = sadd.s32 %s123, 1
      %p127 = scmp.eq.s32.totalorder %s14, 2
      %p128 = scmp.ne.s32.totalorder %s123, %s125
      %p129 = scmp.eq.s32.totalorder %s14, 0
      %p130 = por %p128, %p129
      %p131 = scmp.ne.s32.totalorder %s123, %s125
      %p132 = scmp.eq.s32.totalorder %s19, 2
      %p133 = por %p131, %p132
      %p134 = scmp.ne.s32.totalorder %s125, %s126
      %p135 = scmp.eq.s32.totalorder %s19, 0
      %p136 = por %p134, %p135
      %p137 = scmp.ne.s32.totalorder %s125, %s126
      %p138 = scmp.eq.s32.totalorder %s20, 2
      %p139 = por %p137, %p138
      %p141 = scmp.ne.s32.totalorder %s126, %s140
      %p142 = scmp.eq.s32.totalorder %s20, 0
      %p143 = por %p141, %p142
      %s144 = ssub.s32 %s22, %s29
      %p145 = scmp.eq.s32.totalorder %s144, 0
      %s147 = sadd.s32 %s146, 1
      %s148 = scalar_select %p145, %s146, %s147
      %p151 = pneg %p145
      %p152 = scmp.eq.s32.totalorder %s14, 2
      %p153 = por %p151, %p152
      %p154 = scmp.ne.s32.totalorder %s146, %s149
      %p155 = scmp.eq.s32.totalorder %s14, 0
      %p156 = por %p154, %p155
      %p157 = scmp.ne.s32.totalorder %s146, %s149
      %p158 = scmp.eq.s32.totalorder %s19, 2
      %p159 = por %p157, %p158
      %p160 = scmp.ne.s32.totalorder %s149, %s150
      %p161 = scmp.eq.s32.totalorder %s19, 0
      %p162 = por %p160, %p161
      %p163 = scmp.ne.s32.totalorder %s149, %s150
      %p164 = scmp.eq.s32.totalorder %s20, 2
      %p165 = por %p163, %p164
      %p167 = scmp.ne.s32.totalorder %s150, %s166
      %p168 = scmp.eq.s32.totalorder %s20, 0
      %p169 = por %p167, %p168
      %p170 = scmp.le.s32.totalorder 1, %s14
      %p171 = scmp.lt.s32.totalorder %s14, 4
      %p172 = pnand %p170, %p171
      %p173 = pneg %p172
      // Predicated region
      $region9: #{tpu_custom_call.1} parent=5 // pred_check
        _
      $region10: #{tpu_custom_call.1} parent=5 // pred_check_branch
        %175 = sbr.rel (%p172) target = $region12
      $region11: #{tpu_custom_call.1} parent=5 // pred_region
        %s176 = ssub.s32 %s14, 1
        // Predicated region
        $region13: #{tpu_custom_call.1} parent=11 // pred_check
          %p177 = pneg %p52
        $region14: #{tpu_custom_call.1} parent=11 // pred_check_branch
          %179 = sbr.rel (%p177) target = $region16
        $region15: #{tpu_custom_call.1} parent=11 // pred_region
          %s181 = ssub.s32 128, 128
          %182 = vsyncadd [#allocation9], %s181
          %s183 = smul.addr %s24, 128
          %s184 = scalar_lea.hbm %s0, %s183
          %s186 = sshll.u32 [#allocation8], 4
          %s187 = int_to_ptr.vmem [resolvable:$true] %s186
          %189 = dma.hbm_to_vmem [thread:$0]  %s184, 128, %s187, [#allocation9]
        $region16: #{tpu_custom_call.1} parent=11 // pred_fallthru
          _
        // Predicated region
        $region17: #{tpu_custom_call.1} parent=11 // pred_check
          %p190 = pneg %p73
        $region18: #{tpu_custom_call.1} parent=11 // pred_check_branch
          %192 = sbr.rel (%p190) target = $region20
        $region19: #{tpu_custom_call.1} parent=11 // pred_region
          %s194 = ssub.s32 2048, 2048
          %195 = vsyncadd [#allocation12], %s194
          %s196 = sshll.u32 [#allocation11], 4
          %s197 = int_to_ptr.vmem [resolvable:$true] %s196
          %202 = dma.hbm_to_vmem [thread:$0]  %s1, 2048, %s197, [#allocation12], 128, 128, 8
        $region20: #{tpu_custom_call.1} parent=11 // pred_fallthru
          _
        // Predicated region
        $region21: #{tpu_custom_call.1} parent=11 // pred_check
          %p203 = pneg %p94
        $region22: #{tpu_custom_call.1} parent=11 // pred_check_branch
          %205 = sbr.rel (%p203) target = $region24
        $region23: #{tpu_custom_call.1} parent=11 // pred_region
          %s207 = ssub.s32 2048, 2048
          %208 = vsyncadd [#allocation12], %s207
          %s209 = sshll.u32 [#allocation13], 4
          %s210 = int_to_ptr.vmem [resolvable:$true] %s209
          %215 = dma.hbm_to_vmem [thread:$0]  %s2, 2048, %s210, [#allocation12], 128, 128, 8
        $region24: #{tpu_custom_call.1} parent=11 // pred_fallthru
          _
        // Predicated region
        $region25: #{tpu_custom_call.1} parent=11 // pred_check
          %p216 = pneg %p115
        $region26: #{tpu_custom_call.1} parent=11 // pred_check_branch
          %218 = sbr.rel (%p216) target = $region28
        $region27: #{tpu_custom_call.1} parent=11 // pred_region
          _
        $region28: #{tpu_custom_call.1} parent=11 // pred_fallthru
          _
        // Predicated region
        $region29: #{tpu_custom_call.1} parent=11 // pred_check
          %p219 = pneg %p136
        $region30: #{tpu_custom_call.1} parent=11 // pred_check_branch
          %221 = sbr.rel (%p219) target = $region32
        $region31: #{tpu_custom_call.1} parent=11 // pred_region
          _
        $region32: #{tpu_custom_call.1} parent=11 // pred_fallthru
          _
      $region12: #{tpu_custom_call.1} parent=5 // pred_fallthru
        _
      %p222 = scmp.lt.s32.totalorder %s14, 3
      // Predicated region
      $region33: #{tpu_custom_call.1} parent=5 // pred_check
        %p223 = pneg %p222
      $region34: #{tpu_custom_call.1} parent=5 // pred_check_branch
        %225 = sbr.rel (%p223) target = $region36
      $region35: #{tpu_custom_call.1} parent=5 // pred_region
        _
      $region36: #{tpu_custom_call.1} parent=5 // pred_fallthru
        _
      %p226 = scmp.le.s32.totalorder 1, %s14
      %p227 = scmp.lt.s32.totalorder %s14, 4
      %p228 = pnand %p226, %p227
      %p229 = pneg %p228
      // Predicated region
      $region37: #{tpu_custom_call.1} parent=5 // pred_check
        _
      $region38: #{tpu_custom_call.1} parent=5 // pred_check_branch
        %231 = sbr.rel (%p228) target = $region40
      $region39: #{tpu_custom_call.1} parent=5 // pred_region
        %s232 = ssub.s32 %s14, 1
        // Predicated region
        $region41: #{tpu_custom_call.1} parent=39 // pred_check
          %p233 = pneg %p52
        $region42: #{tpu_custom_call.1} parent=39 // pred_check_branch
          %235 = sbr.rel (%p233) target = $region44
        $region43: #{tpu_custom_call.1} parent=39 // pred_region
          %236 = dma.done [#allocation9], 128
        $region44: #{tpu_custom_call.1} parent=39 // pred_fallthru
          _
        // Predicated region
        $region45: #{tpu_custom_call.1} parent=39 // pred_check
          %p237 = pneg %p73
        $region46: #{tpu_custom_call.1} parent=39 // pred_check_branch
          %239 = sbr.rel (%p237) target = $region48
        $region47: #{tpu_custom_call.1} parent=39 // pred_region
          %240 = dma.done [#allocation12], 2048
        $region48: #{tpu_custom_call.1} parent=39 // pred_fallthru
          _
        // Predicated region
        $region49: #{tpu_custom_call.1} parent=39 // pred_check
          %p241 = pneg %p94
        $region50: #{tpu_custom_call.1} parent=39 // pred_check_branch
          %243 = sbr.rel (%p241) target = $region52
        $region51: #{tpu_custom_call.1} parent=39 // pred_region
          %244 = dma.done [#allocation12], 2048
        $region52: #{tpu_custom_call.1} parent=39 // pred_fallthru
          _
        %p245 = pneg %p52
        %p246 = pneg %p49
        %p247 = pneg %p73
        %p248 = pneg %p70
        %p249 = pneg %p94
        %p250 = pneg %p91
        %p251 = pneg %p115
        %p252 = pneg %p112
        %p253 = pneg %p136
        %p254 = pneg %p133
        %p255 = pneg %p162
        %p256 = pneg %p159
        %v257 = vld [vmem:[#allocation8] sm:$0xff]
        %v258 = vld [vmem:[#allocation11] sm:$0xff]
        %v259 = vld [vmem:[#allocation11 + $0x8] sm:$0xff]
        %v260 = vld [vmem:[#allocation11 + $0x10] sm:$0xff]
        %v261 = vld [vmem:[#allocation11 + $0x18] sm:$0xff]
        %v262 = vld [vmem:[#allocation11 + $0x20] sm:$0xff]
        %v263 = vld [vmem:[#allocation11 + $0x28] sm:$0xff]
        %v264 = vld [vmem:[#allocation11 + $0x30] sm:$0xff]
        %v265 = vld [vmem:[#allocation11 + $0x38] sm:$0xff]
        %v266 = vld [vmem:[#allocation11 + $0x40] sm:$0xff]
        %v267 = vld [vmem:[#allocation11 + $0x48] sm:$0xff]
        %v268 = vld [vmem:[#allocation11 + $0x50] sm:$0xff]
        %v269 = vld [vmem:[#allocation11 + $0x58] sm:$0xff]
        %v270 = vld [vmem:[#allocation11 + $0x60] sm:$0xff]
        %v271 = vld [vmem:[#allocation11 + $0x68] sm:$0xff]
        %v272 = vld [vmem:[#allocation11 + $0x70] sm:$0xff]
        %v273 = vld [vmem:[#allocation11 + $0x78] sm:$0xff]
        %274 = vmatprep.subr.mxu0 0.0
        %275 = vmatpush1.msra.mxu0 %v273
        %276 = vmatprep.subr.mxu0 0.0
        %277 = vmatpush1.msra.mxu0 %v272
        %278 = vmatprep.subr.mxu0 0.0
        %279 = vmatpush1.msra.mxu0 %v271
        %280 = vmatprep.subr.mxu0 0.0
        %281 = vmatpush1.msra.mxu0 %v270
        %282 = vmatprep.subr.mxu0 0.0
        %283 = vmatpush1.msra.mxu0 %v269
        %284 = vmatprep.subr.mxu0 0.0
        %285 = vmatpush1.msra.mxu0 %v268
        %286 = vmatprep.subr.mxu0 0.0
        %287 = vmatpush1.msra.mxu0 %v267
        %288 = vmatprep.subr.mxu0 0.0
        %289 = vmatpush1.msra.mxu0 %v266
        %290 = vmatprep.subr.mxu0 0.0
        %291 = vmatpush1.msra.mxu0 %v265
        %292 = vmatprep.subr.mxu0 0.0
        %293 = vmatpush1.msra.mxu0 %v264
        %294 = vmatprep.subr.mxu0 0.0
        %295 = vmatpush1.msra.mxu0 %v263
        %296 = vmatprep.subr.mxu0 0.0
        %297 = vmatpush1.msra.mxu0 %v262
        %298 = vmatprep.subr.mxu0 0.0
        %299 = vmatpush1.msra.mxu0 %v261
        %300 = vmatprep.subr.mxu0 0.0
        %301 = vmatpush1.msra.mxu0 %v260
        %302 = vmatprep.subr.mxu0 0.0
        %303 = vmatpush1.msra.mxu0 %v259
        %304 = vmatprep.subr.mxu0 0.0
        %305 = vmatpush1.msra.mxu0 %v258
        %306 = vmatprep.subr.mxu0 0.0
        %307 = vmatpush2.msra.mxu0 0.0
        %308 = vmatprep.subr.mxu0 0.0
        %309 = vmatpush2.msra.mxu0 0.0
        %310 = vmatprep.subr.mxu0 0.0
        %311 = vmatpush2.msra.mxu0 0.0
        %312 = vmatprep.subr.mxu0 0.0
        %313 = vmatpush2.msra.mxu0 0.0
        %314 = vmatprep.subr.mxu0 0.0
        %315 = vmatpush2.msra.mxu0 0.0
        %316 = vmatprep.subr.mxu0 0.0
        %317 = vmatpush2.msra.mxu0 0.0
        %318 = vmatprep.subr.mxu0 0.0
        %319 = vmatpush2.msra.mxu0 0.0
        %320 = vmatprep.subr.mxu0 0.0
        %321 = vmatpush2.msra.mxu0 0.0
        %322 = vmatprep.subr.mxu0 0.0
        %323 = vmatpush2.msra.mxu0 0.0
        %324 = vmatprep.subr.mxu0 0.0
        %325 = vmatpush2.msra.mxu0 0.0
        %326 = vmatprep.subr.mxu0 0.0
        %327 = vmatpush2.msra.mxu0 0.0
        %328 = vmatprep.subr.mxu0 0.0
        %329 = vmatpush2.msra.mxu0 0.0
        %330 = vmatprep.subr.mxu0 0.0
        %331 = vmatpush2.msra.mxu0 0.0
        %332 = vmatprep.subr.mxu0 0.0
        %333 = vmatpush2.msra.mxu0 0.0
        %334 = vmatprep.subr.mxu0 0.0
        %335 = vmatpush2.msra.mxu0 0.0
        %336 = vmatprep.subr.mxu0 0.0
        %337 = vmatpush2.msra.mxu0 0.0
        %338 = vmatprep.mubr.f32.mxu0 0.0
        %339 = vmatmul.mubr.f32.gmra.mxu0 %v257
        %v340 = vpop.f32.mrf.mxu0
        %v341 = vadd.f32 0.0, %v340
        %v342 = vpop.f32.mrf.mxu0
        %343 = vdwg.mxu0
        %p344 = scmp.eq.s32.totalorder %s23, 0
        // Predicated region
        $region53: #{tpu_custom_call.1} parent=39 // pred_check
          %p345 = pneg %p344
        $region54: #{tpu_custom_call.1} parent=39 // pred_check_branch
          %347 = sbr.rel (%p345) target = $region56
        $region55: #{tpu_custom_call.1} parent=39 // pred_region
          %p348 = scmp.eq.s32.totalorder %s24, 0
          // Predicated region
          $region57: #{tpu_custom_call.1} parent=55 // pred_check
            %p349 = pneg %p348
          $region58: #{tpu_custom_call.1} parent=55 // pred_check_branch
            %351 = sbr.rel (%p349) target = $region60
          $region59: #{tpu_custom_call.1} parent=55 // pred_region
            %352 = vst [vmem:[#allocation2] sm:$0x1] 0.0
            %353 = vst [vmem:[#allocation3] sm:$0x1] 0.0
          $region60: #{tpu_custom_call.1} parent=55 // pred_fallthru
            _
          %v354 = vld [vmem:[#allocation2] sm:$0x1]
          %v355 = vrot.slane %v341, 4
          %v356 = vadd.f32 %v341, %v355
          %v357 = vrot.slane %v356, 2
          %v358 = vadd.f32 %v356, %v357
          %v359 = vrot.slane %v358, 1
          %v360 = vadd.f32 %v358, %v359
          %v361 = vadd.f32 %v354, %v360
          %362 = vst [vmem:[#allocation2] sm:$0x1] %v361
          %v363 = vld [vmem:[#allocation3] sm:$0x1]
          %v364 = vmul.f32 %v341, %v341
          %v365 = vrot.slane %v364, 4
          %v366 = vadd.f32 %v364, %v365
          %v367 = vrot.slane %v366, 2
          %v368 = vadd.f32 %v366, %v367
          %v369 = vrot.slane %v368, 1
          %v370 = vadd.f32 %v368, %v369
          %v371 = vadd.f32 %v363, %v370
          %372 = vst [vmem:[#allocation3] sm:$0x1] %v371
          // Predicated region
          $region61: #{tpu_custom_call.1} parent=55 // pred_check
            %p373 = pneg %p348
          $region62: #{tpu_custom_call.1} parent=55 // pred_check_branch
            %375 = sbr.rel (%p373) target = $region64
          $region63: #{tpu_custom_call.1} parent=55 // pred_region
            %v376 = vld [vmem:[#allocation2] sm:$0x1]
            %v377 = vmul.f32 %v376, 0.125
            %v378 = vld [vmem:[#allocation3] sm:$0x1]
            %v379 = vmul.f32 %v378, 0.125
            %v380 = vmul.f32 %v377, %v377
            %v381 = vsub.f32 %v379, %v380
            %v382 = vmax.f32 %v381, 0.0
            %v383 = vld [vmem:[%s3] sm:$0x1]
            %v384 = vadd.f32 %v382, 1e-05
            %v385 = vrsqrt.pop %v384
            %v386 = vmul.f32 %v383, %v385
            %387 = vst [vmem:[#allocation4] sm:$0x1] %v386
            %v388 = vld [vmem:[%s3 + $0x1] sm:$0x1]
            %v389 = vmul.f32 %v377, %v386
            %v390 = vsub.f32 %v388, %v389
            %391 = vst [vmem:[#allocation4 + $0x1] sm:$0x1] %v390
          $region64: #{tpu_custom_call.1} parent=55 // pred_fallthru
            _
        $region56: #{tpu_custom_call.1} parent=39 // pred_fallthru
          _
        %p392 = scmp.ge.s32.totalorder %s23, 1
        // Predicated region
        $region65: #{tpu_custom_call.1} parent=39 // pred_check
          %p393 = pneg %p392
        $region66: #{tpu_custom_call.1} parent=39 // pred_check_branch
          %395 = sbr.rel (%p393) target = $region68
        $region67: #{tpu_custom_call.1} parent=39 // pred_region
          %v396 = vld [vmem:[#allocation4] sm:$0x1]
          %v397 = vlaneseq
          %v398 = vshrl.u32 %v397, 7
          %v399 = vsub.s32 0, %v398
          %v400 = vrot.slane %v396, %v399
          %v401 = vmul.f32 %v341, %v400
          %v402 = vld [vmem:[#allocation4 + $0x1] sm:$0x1]
          %v403 = vlaneseq
          %v404 = vshrl.u32 %v403, 7
          %v405 = vsub.s32 0, %v404
          %v406 = vrot.slane %v402, %v405
          %v407 = vadd.f32 %v401, %v406
          %v408 = vmax.f32 %v407, 0.0
          %v409 = vld [vmem:[#allocation13] sm:$0xff]
          %v410 = vld [vmem:[#allocation13 + $0x8] sm:$0xff]
          %v411 = vld [vmem:[#allocation13 + $0x10] sm:$0xff]
          %v412 = vld [vmem:[#allocation13 + $0x18] sm:$0xff]
          %v413 = vld [vmem:[#allocation13 + $0x20] sm:$0xff]
          %v414 = vld [vmem:[#allocation13 + $0x28] sm:$0xff]
          %v415 = vld [vmem:[#allocation13 + $0x30] sm:$0xff]
          %v416 = vld [vmem:[#allocation13 + $0x38] sm:$0xff]
          %v417 = vld [vmem:[#allocation13 + $0x40] sm:$0xff]
          %v418 = vld [vmem:[#allocation13 + $0x48] sm:$0xff]
          %v419 = vld [vmem:[#allocation13 + $0x50] sm:$0xff]
          %v420 = vld [vmem:[#allocation13 + $0x58] sm:$0xff]
          %v421 = vld [vmem:[#allocation13 + $0x60] sm:$0xff]
          %v422 = vld [vmem:[#allocation13 + $0x68] sm:$0xff]
          %v423 = vld [vmem:[#allocation13 + $0x70] sm:$0xff]
          %v424 = vld [vmem:[#allocation13 + $0x78] sm:$0xff]
          %425 = vmatprep.subr.mxu0 0.0
          %426 = vmatpush1.msra.mxu0 %v424
          %427 = vmatprep.subr.mxu0 0.0
          %428 = vmatpush1.msra.mxu0 %v423
          %429 = vmatprep.subr.mxu0 0.0
          %430 = vmatpush1.msra.mxu0 %v422
          %431 = vmatprep.subr.mxu0 0.0
          %432 = vmatpush1.msra.mxu0 %v421
          %433 = vmatprep.subr.mxu0 0.0
          %434 = vmatpush1.msra.mxu0 %v420
          %435 = vmatprep.subr.mxu0 0.0
          %436 = vmatpush1.msra.mxu0 %v419
          %437 = vmatprep.subr.mxu0 0.0
          %438 = vmatpush1.msra.mxu0 %v418
          %439 = vmatprep.subr.mxu0 0.0
          %440 = vmatpush1.msra.mxu0 %v417
          %441 = vmatprep.subr.mxu0 0.0
          %442 = vmatpush1.msra.mxu0 %v416
          %443 = vmatprep.subr.mxu0 0.0
          %444 = vmatpush1.msra.mxu0 %v415
          %445 = vmatprep.subr.mxu0 0.0
          %446 = vmatpush1.msra.mxu0 %v414
          %447 = vmatprep.subr.mxu0 0.0
          %448 = vmatpush1.msra.mxu0 %v413
          %449 = vmatprep.subr.mxu0 0.0
          %450 = vmatpush1.msra.mxu0 %v412
          %451 = vmatprep.subr.mxu0 0.0
          %452 = vmatpush1.msra.mxu0 %v411
          %453 = vmatprep.subr.mxu0 0.0
          %454 = vmatpush1.msra.mxu0 %v410
          %455 = vmatprep.subr.mxu0 0.0
          %456 = vmatpush1.msra.mxu0 %v409
          %457 = vmatprep.subr.mxu0 0.0
          %458 = vmatpush2.msra.mxu0 0.0
          %459 = vmatprep.subr.mxu0 0.0
          %460 = vmatpush2.msra.mxu0 0.0
          %461 = vmatprep.subr.mxu0 0.0
          %462 = vmatpush2.msra.mxu0 0.0
          %463 = vmatprep.subr.mxu0 0.0
          %464 = vmatpush2.msra.mxu0 0.0
          %465 = vmatprep.subr.mxu0 0.0
          %466 = vmatpush2.msra.mxu0 0.0
          %467 = vmatprep.subr.mxu0 0.0
          %468 = vmatpush2.msra.mxu0 0.0
          %469 = vmatprep.subr.mxu0 0.0
          %470 = vmatpush2.msra.mxu0 0.0
          %471 = vmatprep.subr.mxu0 0.0
          %472 = vmatpush2.msra.mxu0 0.0
          %473 = vmatprep.subr.mxu0 0.0
          %474 = vmatpush2.msra.mxu0 0.0
          %475 = vmatprep.subr.mxu0 0.0
          %476 = vmatpush2.msra.mxu0 0.0
          %477 = vmatprep.subr.mxu0 0.0
          %478 = vmatpush2.msra.mxu0 0.0
          %479 = vmatprep.subr.mxu0 0.0
          %480 = vmatpush2.msra.mxu0 0.0
          %481 = vmatprep.subr.mxu0 0.0
          %482 = vmatpush2.msra.mxu0 0.0
          %483 = vmatprep.subr.mxu0 0.0
          %484 = vmatpush2.msra.mxu0 0.0
          %485 = vmatprep.subr.mxu0 0.0
          %486 = vmatpush2.msra.mxu0 0.0
          %487 = vmatprep.subr.mxu0 0.0
          %488 = vmatpush2.msra.mxu0 0.0
          %489 = vmatprep.mubr.f32.mxu0 0.0
          %490 = vmatmul.mubr.f32.gmra.mxu0 %v408
          %v491 = vpop.f32.mrf.mxu0
          %v492 = vadd.f32 0.0, %v491
          %v493 = vpop.f32.mrf.mxu0
          %494 = vdwg.mxu0
          %p495 = scmp.eq.s32.totalorder %s23, 1
          // Predicated region
          $region69: #{tpu_custom_call.1} parent=67 // pred_check
            %p496 = pneg %p495
          $region70: #{tpu_custom_call.1} parent=67 // pred_check_branch
            %498 = sbr.rel (%p496) target = $region72
          $region71: #{tpu_custom_call.1} parent=67 // pred_region
            %p499 = scmp.eq.s32.totalorder %s24, 0
            // Predicated region
            $region73: #{tpu_custom_call.1} parent=71 // pred_check
              %p500 = pneg %p499
            $region74: #{tpu_custom_call.1} parent=71 // pred_check_branch
              %502 = sbr.rel (%p500) target = $region76
            $region75: #{tpu_custom_call.1} parent=71 // pred_region
              %503 = vst [vmem:[#allocation5] sm:$0x1] 0.0
              %504 = vst [vmem:[#allocation6] sm:$0x1] 0.0
            $region76: #{tpu_custom_call.1} parent=71 // pred_fallthru
              _
            %v505 = vld [vmem:[#allocation5] sm:$0x1]
            %v506 = vrot.slane %v492, 4
            %v507 = vadd.f32 %v492, %v506
            %v508 = vrot.slane %v507, 2
            %v509 = vadd.f32 %v507, %v508
            %v510 = vrot.slane %v509, 1
            %v511 = vadd.f32 %v509, %v510
            %v512 = vadd.f32 %v505, %v511
            %513 = vst [vmem:[#allocation5] sm:$0x1] %v512
            %v514 = vld [vmem:[#allocation6] sm:$0x1]
            %v515 = vmul.f32 %v492, %v492
            %v516 = vrot.slane %v515, 4
            %v517 = vadd.f32 %v515, %v516
            %v518 = vrot.slane %v517, 2
            %v519 = vadd.f32 %v517, %v518
            %v520 = vrot.slane %v519, 1
            %v521 = vadd.f32 %v519, %v520
            %v522 = vadd.f32 %v514, %v521
            %523 = vst [vmem:[#allocation6] sm:$0x1] %v522
            // Predicated region
            $region77: #{tpu_custom_call.1} parent=71 // pred_check
              %p524 = pneg %p499
            $region78: #{tpu_custom_call.1} parent=71 // pred_check_branch
              %526 = sbr.rel (%p524) target = $region80
            $region79: #{tpu_custom_call.1} parent=71 // pred_region
              %v527 = vld [vmem:[#allocation5] sm:$0x1]
              %v528 = vmul.f32 %v527, 0.125
              %v529 = vld [vmem:[#allocation6] sm:$0x1]
              %v530 = vmul.f32 %v529, 0.125
              %v531 = vmul.f32 %v528, %v528
              %v532 = vsub.f32 %v530, %v531
              %v533 = vmax.f32 %v532, 0.0
              %v534 = vld [vmem:[%s4] sm:$0x1]
              %v535 = vadd.f32 %v533, 1e-05
              %v536 = vrsqrt.pop %v535
              %v537 = vmul.f32 %v534, %v536
              %538 = vst [vmem:[#allocation7] sm:$0x1] %v537
              %v539 = vld [vmem:[%s4 + $0x1] sm:$0x1]
              %v540 = vmul.f32 %v528, %v537
              %v541 = vsub.f32 %v539, %v540
              %542 = vst [vmem:[#allocation7 + $0x1] sm:$0x1] %v541
            $region80: #{tpu_custom_call.1} parent=71 // pred_fallthru
              _
          $region72: #{tpu_custom_call.1} parent=67 // pred_fallthru
            _
          %p543 = scmp.eq.s32.totalorder %s23, 2
          // Predicated region
          $region81: #{tpu_custom_call.1} parent=67 // pred_check
            %p544 = pneg %p543
          $region82: #{tpu_custom_call.1} parent=67 // pred_check_branch
            %546 = sbr.rel (%p544) target = $region84
          $region83: #{tpu_custom_call.1} parent=67 // pred_region
            %v547 = vld [vmem:[#allocation7] sm:$0x1]
            %v548 = vlaneseq
            %v549 = vshrl.u32 %v548, 7
            %v550 = vsub.s32 0, %v549
            %v551 = vrot.slane %v547, %v550
            %v552 = vmul.f32 %v492, %v551
            %v553 = vld [vmem:[#allocation7 + $0x1] sm:$0x1]
            %v554 = vlaneseq
            %v555 = vshrl.u32 %v554, 7
            %v556 = vsub.s32 0, %v555
            %v557 = vrot.slane %v553, %v556
            %v558 = vadd.f32 %v552, %v557
            %559 = vst [vmem:[#allocation14] sm:$0xff] %v558
          $region84: #{tpu_custom_call.1} parent=67 // pred_fallthru
            _
        $region68: #{tpu_custom_call.1} parent=39 // pred_fallthru
          _
        // Predicated region
        $region85: #{tpu_custom_call.1} parent=39 // pred_check
          %p560 = pneg %p159
        $region86: #{tpu_custom_call.1} parent=39 // pred_check_branch
          %562 = sbr.rel (%p560) target = $region88
        $region87: #{tpu_custom_call.1} parent=39 // pred_region
          %s564 = ssub.s32 128, 128
          %565 = vsyncadd [#allocation10], %s564
          %s566 = smul.addr %s24, 128
          %s567 = scalar_lea.hbm %s5, %s566
          %s569 = sshll.u32 [#allocation14], 4
          %s570 = int_to_ptr.vmem [resolvable:$true] %s569
          %572 = dma.vmem_to_hbm [thread:$0]  %s570, 128, %s567, [#allocation10]
        $region88: #{tpu_custom_call.1} parent=39 // pred_fallthru
          _
        // Predicated region
        $region89: #{tpu_custom_call.1} parent=39 // pred_check
          %p573 = pneg %p159
        $region90: #{tpu_custom_call.1} parent=39 // pred_check_branch
          %575 = sbr.rel (%p573) target = $region92
        $region91: #{tpu_custom_call.1} parent=39 // pred_region
          %576 = dma.done [#allocation10], 128
        $region92: #{tpu_custom_call.1} parent=39 // pred_fallthru
          _
      $region40: #{tpu_custom_call.1} parent=5 // pred_fallthru
        _
      %p577 = scmp.le.s32.totalorder 2, %s14
      // Predicated region
      $region93: #{tpu_custom_call.1} parent=5 // pred_check
        %p578 = pneg %p577
      $region94: #{tpu_custom_call.1} parent=5 // pred_check_branch
        %580 = sbr.rel (%p578) target = $region96
      $region95: #{tpu_custom_call.1} parent=5 // pred_region
        %s581 = ssub.s32 %s14, 2
      $region96: #{tpu_custom_call.1} parent=5 // pred_fallthru
        _
    $region6: #{tpu_custom_call.1} parent=1 // loop_footer
      %s18 = sadd.s32 1, %s14
    $region7: #{tpu_custom_call.1} parent=1 // loop_footer_branch
      %13 = sbr.rel target = $region3
    $region8: #{tpu_custom_call.1} parent=1 // loop_exit
      _
    %582 = vsyncpa [#allocation9], 1
    %s583 = scalar_lea.sflag [#allocation9], 1
    %584 = vsyncpa %s583, 1
    %585 = vsyncpa [#allocation12], 1
    %586 = vsyncpa [#allocation10], 1
    %s587 = scalar_lea.sflag [#allocation10], 1
    %588 = vsyncpa %s587, 1

</llo_original>
